<compile_context>
chip_gen: v6e
topology: v6e:2x2x1
jax: 0.10.0
libtpu: 0.0.40
codegen_flags: <defaults>
</compile_context>

<pallas_src>
import jax
import jax.numpy as jnp
from jax.experimental import pallas as pl
from jax.experimental.pallas import tpu as pltpu  # noqa: F401

# ----------------------------- configuration --------------------------------
B, C_IN, H, W = 2, 4, 16, 16
C_OUT = 8
KH = KW = 3
KK = KH * KW
STRIDE = 1          # forward's .view(B, ..., H, W) is only valid for stride=1
RR = 1              # reduction_ratio
GROUPS = 2
C_RED = C_OUT // RR
CG = C_OUT // GROUPS
PAD = 1

WC_IN = W * C_IN                  # 64   fused input lanes  (w*C_IN + c_in)
WC = W * C_OUT                    # 128  fused output lanes (w*C_OUT + c_out)
BH = B * H                        # 32   fused batch*height rows
N_FEAT_COLS = KW * WC             # 384  width-shifted feature columns
N_KER_COLS = KK * WC              # 1152 per-tap involution-weight columns


# --------------------------- Pallas kernel -----------------------------------
def _inv2d_fused_kernel(x3_ref, wf_ref, wk_ref, bk_ref, o_ref):
    """Fused 1x1 convs + 3x3 involution for BOTH batch elements at once.

    x3_ref: (KH*B*H, W*C_IN) bf16 -- KH height-shifted, zero-padded copies of
            the lane-fused input rows, ordered (shift, batch, height).
    wf_ref: (W*C_IN, KW*W*C_OUT) bf16 -- KW width-shifted block-diag copies of
            the feature_extractor weight.
    wk_ref: (W*C_IN, KK*W*C_OUT) bf16 -- KK block-diag copies of
            (w_red @ w_span), pre-broadcast across the CG lanes of each group.
    bk_ref: (1, KK*W*C_OUT) f32 -- span bias, broadcast the same way.
    o_ref : (B*H, W*C_OUT) f32 -- lane-dense fused output.
    """
    x3 = x3_ref[...]                                      # (96, 64) bf16

    # One bf16 MXU pass -> all 9 zero-padded shifted feature windows for both
    # batch elements, already lane-dense.  f32 accumulate.
    r_feat = jnp.dot(x3, wf_ref[...],
                     preferred_element_type=jnp.float32)  # (96, 384) f32

    # The span/reduce branch only needs the UNSHIFTED (ih == PAD) rows, which
    # are contiguous and aligned in the (shift, batch, height) layout: this
    # matmul is 1/3 the rows of the old fused one, and the bias is only added
    # where it is actually read.
    x_mid = x3[PAD * BH:(PAD + 1) * BH]                   # (32, 64) bf16
    r_ker = jnp.dot(x_mid, wk_ref[...],
                    preferred_element_type=jnp.float32) + bk_ref[...]  # (32, 1152)

    acc = jnp.zeros((BH, WC), jnp.float32)
    for ih in range(KH):
        for iw in range(KW):
            k = ih * KW + iw
            # feature window for tap (ih, iw): rows from the ih-shifted block,
            # columns from the iw-shifted weight block.  (32,128) slice with
            # row offset % 32 == 0 and lane offset % 128 == 0 -> no relayout.
            f = r_feat[ih * BH:(ih + 1) * BH, iw * WC:(iw + 1) * WC]
            # per-pixel tap weight (already broadcast over the CG lanes of
            # each group).
            wk = r_ker[:, k * WC:(k + 1) * WC]
            acc = acc + wk * f
    # Direct, unmasked full-tile store (all 128 lanes live).
    o_ref[...] = acc.astype(o_ref.dtype)


# ------------------------- wrapper-side plumbing ------------------------------
def _fuse_params(params):
    """Fold the Inv2d linear structure into two small bf16 weights + f32 bias."""
    f32 = jnp.float32

    # reduce -> span is purely linear in forward() (bn / ReLU unused), so fold.
    # TODO(synk): if a nonlinearity were ever applied between reduce and span,
    # this algebraic fusion must be reverted.
    w_comp = params["w_red"].astype(f32) @ params["w_span"].astype(f32)   # (C_IN, GROUPS*KK)

    # Pre-broadcast each tap's group weight across the CG channels of its group:
    # column (k, g, c) of w_ker_small  <-  column g*KK + k of w_comp.
    col = jnp.asarray([g * KK + k
                       for k in range(KK)
                       for g in range(GROUPS)
                       for _ in range(CG)])
    w_ker_small = w_comp[:, col]                                  # (C_IN, KK*C_OUT)
    b_ker_small = params["b_span"][col]                           # (KK*C_OUT,)

    # Width shifts baked into block-(off)diagonal weights:
    #   E[iw][w_in, w_out] = 1 iff w_in == w_out + (iw - PAD)   (zero => zero pad)
    shift_eyes = jnp.stack(
        [jnp.eye(W, k=-(iw - PAD), dtype=f32) for iw in range(KW)])   # (KW, W, W)
    w_feat = jnp.einsum("kvw,cd->vckwd", shift_eyes, params["w_fe"].astype(f32))
    w_feat = w_feat.reshape(WC_IN, N_FEAT_COLS)                   # (64, 384)

    w_ker = jnp.einsum("vw,cjd->vcjwd", jnp.eye(W, dtype=f32),
                       w_ker_small.reshape(C_IN, KK, C_OUT))
    w_ker = w_ker.reshape(WC_IN, N_KER_COLS)                      # (64, 1152)

    b_ker = jnp.broadcast_to(b_ker_small.reshape(KK, 1, C_OUT),
                             (KK, W, C_OUT)).reshape(1, N_KER_COLS)

    # bf16 operands: single-pass MXU + half the weight DMA; bias stays f32
    # (it is added to the f32 matmul result).
    return (w_feat.astype(jnp.bfloat16),
            w_ker.astype(jnp.bfloat16),
            b_ker.astype(f32))


def inv2d_forward(x_nchw, params):
    # TODO(synk): in a real deployment keep the (B, H, W*C) lane-fused layout
    # across the surrounding graph and precompute the fused weights once; the
    # NCHW<->fused layout round-trip here costs more than the kernel itself.
    # NCHW -> lane-fused rows: x_f[b, h, w*C_IN + c] = x[b, c, h, w]
    x_f = jnp.transpose(x_nchw, (0, 2, 3, 1)).reshape(B, H, WC_IN)
    # Stack the KH height-shifted (zero padded) copies, ordered (shift, b, h),
    # so the kernel needs no sublane shifts and the unshifted rows stay
    # contiguous:  x3[ih*B*H + b*H + h] = x_f[b, h + ih - PAD] (zero if OOB).
    xp = jnp.pad(x_f, ((0, 0), (PAD, PAD), (0, 0)))
    x3 = jnp.stack([xp[:, ih:ih + H, :] for ih in range(KH)], axis=0)
    x3 = x3.reshape(KH * BH, WC_IN).astype(jnp.bfloat16)

    # In a real deployment these fused operands are precomputed once.
    w_feat, w_ker, b_ker = _fuse_params(params)

    # Single no-grid invocation: both batch elements folded into the matmul M
    # dimension (no grid-step overhead, one weight fetch, no double buffering).
    out = pl.pallas_call(
        _inv2d_fused_kernel,
        out_shape=jax.ShapeDtypeStruct((BH, WC), jnp.float32),
    )(x3, w_feat, w_ker, b_ker)

    # fused (B*H, W*C_OUT) -> NCHW
    out = out.reshape(B, H, W, C_OUT)
    return jnp.transpose(out, (0, 3, 1, 2))


# -------------------------- pure-JAX reference --------------------------------
def inv2d_reference(x_nchw, params):
    hp = jax.lax.Precision.HIGHEST
    x = jnp.transpose(x_nchw, (0, 2, 3, 1))
    feat = jnp.einsum("bhwc,cd->bhwd", x, params["w_fe"], precision=hp)
    red = jnp.einsum("bhwc,cd->bhwd", x, params["w_red"], precision=hp)
    ker = jnp.einsum("bhwc,cd->bhwd", red, params["w_span"], precision=hp) + params["b_span"]
    # TODO(synk): self.bn and self.activation exist in __init__ but are unused
    # in forward(), so they are intentionally not applied.
    featp = jnp.pad(feat, ((0, 0), (PAD, PAD), (PAD, PAD), (0, 0)))
    out = jnp.zeros((B, H, W, C_OUT), jnp.float32)
    for g in range(GROUPS):
        acc = jnp.zeros((B, H, W, CG), jnp.float32)
        for ih in range(KH):
            for iw in range(KW):
                k = ih * KW + iw
                wgt = ker[..., g * KK + k: g * KK + k + 1]
                patch = featp[:, ih:ih + H, iw:iw + W, g * CG:(g + 1) * CG]
                acc = acc + wgt * patch
        out = out.at[..., g * CG:(g + 1) * CG].set(acc)
    return jnp.transpose(out, (0, 3, 1, 2))


# ----------------------------------- main --------------------------------------
if __name__ == "__main__":
    key = jax.random.PRNGKey(0)
    kx, k1, k2, k3, k4 = jax.random.split(key, 5)

    x = jax.random.normal(kx, (B, C_IN, H, W), jnp.float32)

    # Deterministic synthetic weights (1x1 conv weights stored as (Cin, Cout)).
    params = {
        "w_fe": 0.1 * jax.random.normal(k1, (C_IN, C_OUT), jnp.float32),
        "w_red": 0.1 * jax.random.normal(k2, (C_IN, C_RED), jnp.float32),
        "w_span": 0.1 * jax.random.normal(k3, (C_RED, GROUPS * KK), jnp.float32),
        "b_span": 0.1 * jax.random.normal(k4, (GROUPS * KK,), jnp.float32),
    }

    out = jax.block_until_ready(jax.jit(inv2d_forward)(x, params))
    ref = jax.block_until_ready(inv2d_reference(x, params))

    assert out.shape == (B, C_OUT, H, W)
    max_err = float(jnp.max(jnp.abs(out - ref)))
    # tolerance covers the bf16 operand cast (f32 accumulate) and summation-order
    # differences vs. the f32 reference
    assert jnp.allclose(out, ref, atol=1e-2, rtol=1e-2), max_err

    print("KERNEL_OK")
</pallas_src>

<mosaic_0001>
module attributes {stable_mosaic.version = 11 : i64} {
  func.func @_inv2d_fused_kernel(%arg0: memref<96x64xbf16, #tpu.memory_space<vmem>>, %arg1: memref<64x384xbf16, #tpu.memory_space<vmem>>, %arg2: memref<64x1152xbf16, #tpu.memory_space<vmem>>, %arg3: memref<1x1152xf32, #tpu.memory_space<vmem>>, %arg4: memref<32x128xf32, #tpu.memory_space<vmem>>) attributes {dimension_semantics = [], scalar_prefetch = 0 : i64, scratch_operands = 0 : i64, tpu.core_type = #tpu.core_type<tc>} {
    %c0 = arith.constant 0 : index
    %c0_0 = arith.constant 0 : index
    %0 = vector.load %arg0[%c0, %c0_0] : memref<96x64xbf16, #tpu.memory_space<vmem>>, vector<96x64xbf16>
    %c0_1 = arith.constant 0 : index
    %c0_2 = arith.constant 0 : index
    %1 = vector.load %arg1[%c0_1, %c0_2] : memref<64x384xbf16, #tpu.memory_space<vmem>>, vector<64x384xbf16>
    %cst = arith.constant dense<0.000000e+00> : vector<96x384xf32>
    %2 = tpu.matmul %0, %1, %cst {dimension_numbers = #tpu.dot_dimension_numbers<[1], [0], [0], [1], [0, 0, 1, 1], [], []>} : vector<96x64xbf16>, vector<64x384xbf16>, vector<96x384xf32> -> vector<96x384xf32>
    %3 = vector.extract_strided_slice %0 {offsets = [32, 0], sizes = [32, 64], strides = [1, 1]} : vector<96x64xbf16> to vector<32x64xbf16>
    %c0_3 = arith.constant 0 : index
    %c0_4 = arith.constant 0 : index
    %4 = vector.load %arg2[%c0_3, %c0_4] : memref<64x1152xbf16, #tpu.memory_space<vmem>>, vector<64x1152xbf16>
    %cst_5 = arith.constant dense<0.000000e+00> : vector<32x1152xf32>
    %5 = tpu.matmul %3, %4, %cst_5 {dimension_numbers = #tpu.dot_dimension_numbers<[1], [0], [0], [1], [0, 0, 1, 1], [], []>} : vector<32x64xbf16>, vector<64x1152xbf16>, vector<32x1152xf32> -> vector<32x1152xf32>
    %c0_6 = arith.constant 0 : index
    %c0_7 = arith.constant 0 : index
    %6 = vector.load %arg3[%c0_6, %c0_7] : memref<1x1152xf32, #tpu.memory_space<vmem>>, vector<1x1152xf32>
    %7 = vector.broadcast %6 : vector<1x1152xf32> to vector<32x1152xf32>
    %8 = arith.addf %5, %7 : vector<32x1152xf32>
    %cst_8 = arith.constant 0.000000e+00 : f32
    %9 = vector.broadcast %cst_8 : f32 to vector<32x128xf32>
    %10 = vector.extract_strided_slice %2 {offsets = [0, 0], sizes = [32, 128], strides = [1, 1]} : vector<96x384xf32> to vector<32x128xf32>
    %11 = vector.extract_strided_slice %8 {offsets = [0, 0], sizes = [32, 128], strides = [1, 1]} : vector<32x1152xf32> to vector<32x128xf32>
    %12 = arith.mulf %11, %10 : vector<32x128xf32>
    %13 = arith.addf %9, %12 : vector<32x128xf32>
    %14 = vector.extract_strided_slice %2 {offsets = [0, 128], sizes = [32, 128], strides = [1, 1]} : vector<96x384xf32> to vector<32x128xf32>
    %15 = vector.extract_strided_slice %8 {offsets = [0, 128], sizes = [32, 128], strides = [1, 1]} : vector<32x1152xf32> to vector<32x128xf32>
    %16 = arith.mulf %15, %14 : vector<32x128xf32>
    %17 = arith.addf %13, %16 : vector<32x128xf32>
    %18 = vector.extract_strided_slice %2 {offsets = [0, 256], sizes = [32, 128], strides = [1, 1]} : vector<96x384xf32> to vector<32x128xf32>
    %19 = vector.extract_strided_slice %8 {offsets = [0, 256], sizes = [32, 128], strides = [1, 1]} : vector<32x1152xf32> to vector<32x128xf32>
    %20 = arith.mulf %19, %18 : vector<32x128xf32>
    %21 = arith.addf %17, %20 : vector<32x128xf32>
    %22 = vector.extract_strided_slice %2 {offsets = [32, 0], sizes = [32, 128], strides = [1, 1]} : vector<96x384xf32> to vector<32x128xf32>
    %23 = vector.extract_strided_slice %8 {offsets = [0, 384], sizes = [32, 128], strides = [1, 1]} : vector<32x1152xf32> to vector<32x128xf32>
    %24 = arith.mulf %23, %22 : vector<32x128xf32>
    %25 = arith.addf %21, %24 : vector<32x128xf32>
    %26 = vector.extract_strided_slice %2 {offsets = [32, 128], sizes = [32, 128], strides = [1, 1]} : vector<96x384xf32> to vector<32x128xf32>
    %27 = vector.extract_strided_slice %8 {offsets = [0, 512], sizes = [32, 128], strides = [1, 1]} : vector<32x1152xf32> to vector<32x128xf32>
    %28 = arith.mulf %27, %26 : vector<32x128xf32>
    %29 = arith.addf %25, %28 : vector<32x128xf32>
    %30 = vector.extract_strided_slice %2 {offsets = [32, 256], sizes = [32, 128], strides = [1, 1]} : vector<96x384xf32> to vector<32x128xf32>
    %31 = vector.extract_strided_slice %8 {offsets = [0, 640], sizes = [32, 128], strides = [1, 1]} : vector<32x1152xf32> to vector<32x128xf32>
    %32 = arith.mulf %31, %30 : vector<32x128xf32>
    %33 = arith.addf %29, %32 : vector<32x128xf32>
    %34 = vector.extract_strided_slice %2 {offsets = [64, 0], sizes = [32, 128], strides = [1, 1]} : vector<96x384xf32> to vector<32x128xf32>
    %35 = vector.extract_strided_slice %8 {offsets = [0, 768], sizes = [32, 128], strides = [1, 1]} : vector<32x1152xf32> to vector<32x128xf32>
    %36 = arith.mulf %35, %34 : vector<32x128xf32>
    %37 = arith.addf %33, %36 : vector<32x128xf32>
    %38 = vector.extract_strided_slice %2 {offsets = [64, 128], sizes = [32, 128], strides = [1, 1]} : vector<96x384xf32> to vector<32x128xf32>
    %39 = vector.extract_strided_slice %8 {offsets = [0, 896], sizes = [32, 128], strides = [1, 1]} : vector<32x1152xf32> to vector<32x128xf32>
    %40 = arith.mulf %39, %38 : vector<32x128xf32>
    %41 = arith.addf %37, %40 : vector<32x128xf32>
    %42 = vector.extract_strided_slice %2 {offsets = [64, 256], sizes = [32, 128], strides = [1, 1]} : vector<96x384xf32> to vector<32x128xf32>
    %43 = vector.extract_strided_slice %8 {offsets = [0, 1024], sizes = [32, 128], strides = [1, 1]} : vector<32x1152xf32> to vector<32x128xf32>
    %44 = arith.mulf %43, %42 : vector<32x128xf32>
    %45 = arith.addf %41, %44 : vector<32x128xf32>
    %c0_9 = arith.constant 0 : index
    %c0_10 = arith.constant 0 : index
    %46 = vector.load %arg4[%c0_9, %c0_10] : memref<32x128xf32, #tpu.memory_space<vmem>>, vector<32x128xf32>
    tpu.vector_store %arg4[%c0_9, %c0_10], %45 {strides = array<i32>} : memref<32x128xf32, #tpu.memory_space<vmem>>, vector<32x128xf32>,
    return
  }
}

</mosaic_0001>

<llo_original>
// kernel: inv2d_forward.1
$region0: #{inv2d_forward.1}
  #allocation0 [shape = 'u32[]', space=smem, size = 0x4, offset = 0x4, fixed_abs, tag = 'smem constant byte address 0x4 - core index']
  #allocation1 [shape = 'u32[144,128]{1,0:T(1,128)}', space=vmem, size = 0x12000, scoped, tag = 'internal scratch']
  %s0 = inlined_call_operand.vmem [shape: bf16[96,64], index: 0, kind: input, shape index: {}]
  %s1 = inlined_call_operand.vmem [shape: bf16[64,384], index: 1, kind: input, shape index: {}]
  %s2 = inlined_call_operand.vmem [shape: bf16[64,1152], index: 2, kind: input, shape index: {}]
  %s3 = inlined_call_operand.vmem [shape: f32[1,1152], index: 3, kind: input, shape index: {}]
  %s4 = inlined_call_operand.vmem [shape: f32[32,128], index: 4, kind: output, shape index: {}]
  %s5 = sld [smem:[#allocation0]]
  $region26: #{inv2d_forward.1} parent=0
    _
  %s7 = ssub.s32 1, %s5
  %s8 = scalar_select 0, %s7, %s5
  // Predicated region
  $region2: #{inv2d_forward.1} parent=0 // pred_check
    _
  $region3: #{inv2d_forward.1} parent=0 // pred_check_branch
    %10 = sbr.rel (0) target = $region5
  $region4: #{inv2d_forward.1} parent=0 // pred_region
    _
  $region5: #{inv2d_forward.1} parent=0 // pred_fallthru
    _
  // Predicated region
  $region6: #{inv2d_forward.1} parent=0 // pred_check
    _
  $region7: #{inv2d_forward.1} parent=0 // pred_check_branch
    %12 = sbr.rel (0) target = $region9
  $region8: #{inv2d_forward.1} parent=0 // pred_region
    _
  $region9: #{inv2d_forward.1} parent=0 // pred_fallthru
    _
  // Predicated region
  $region10: #{inv2d_forward.1} parent=0 // pred_check
    _
  $region11: #{inv2d_forward.1} parent=0 // pred_check_branch
    %14 = sbr.rel (0) target = $region13
  $region12: #{inv2d_forward.1} parent=0 // pred_region
    _
  $region13: #{inv2d_forward.1} parent=0 // pred_fallthru
    _
  // Predicated region
  $region14: #{inv2d_forward.1} parent=0 // pred_check
    _
  $region15: #{inv2d_forward.1} parent=0 // pred_check_branch
    %16 = sbr.rel (0) target = $region17
  $region16: #{inv2d_forward.1} parent=0 // pred_region
    _
  $region17: #{inv2d_forward.1} parent=0 // pred_fallthru
    _
  %v18 = vld [vmem:[%s0] sm:$0xf]
  %v19 = vld [vmem:[%s0 + $0x4] sm:$0xf]
  %v20 = vld [vmem:[%s0 + $0x8] sm:$0xf]
  %v21 = vld [vmem:[%s0 + $0xc] sm:$0xf]
  %v22 = vld [vmem:[%s0 + $0x10] sm:$0xf]
  %v23 = vld [vmem:[%s0 + $0x14] sm:$0xf]
  %v24 = vld [vmem:[%s0 + $0x18] sm:$0xf]
  %v25 = vld [vmem:[%s0 + $0x1c] sm:$0xf]
  %v26 = vld [vmem:[%s0 + $0x20] sm:$0xf]
  %v27 = vld [vmem:[%s0 + $0x24] sm:$0xf]
  %v28 = vld [vmem:[%s0 + $0x28] sm:$0xf]
  %v29 = vld [vmem:[%s0 + $0x2c] sm:$0xf]
  %v30 = vld [vmem:[%s1] sm:$0xff]
  %v31 = vld [vmem:[%s1 + $0x8] sm:$0xf]
  %v32 = vld [vmem:[%s1 + $0xc] sm:$0xff]
  %v33 = vld [vmem:[%s1 + $0x14] sm:$0xf]
  %v34 = vld [vmem:[%s1 + $0x18] sm:$0xff]
  %v35 = vld [vmem:[%s1 + $0x20] sm:$0xf]
  %v36 = vld [vmem:[%s1 + $0x24] sm:$0xff]
  %v37 = vld [vmem:[%s1 + $0x2c] sm:$0xf]
  %v38 = vld [vmem:[%s1 + $0x30] sm:$0xff]
  %v39 = vld [vmem:[%s1 + $0x38] sm:$0xf]
  %v40 = vld [vmem:[%s1 + $0x3c] sm:$0xff]
  %v41 = vld [vmem:[%s1 + $0x44] sm:$0xf]
  %v42 = vld [vmem:[%s1 + $0x48] sm:$0xff]
  %v43 = vld [vmem:[%s1 + $0x50] sm:$0xf]
  %v44 = vld [vmem:[%s1 + $0x54] sm:$0xff]
  %v45 = vld [vmem:[%s1 + $0x5c] sm:$0xf]
  %v58 = vunpack.c.l.b16 %v18
  %v59 = vunpack.c.l.b16 %v19
  %v60 = vunpack.c.l.b16 %v20
  %v61 = vunpack.c.l.b16 %v21
  %v62 = vunpack.c.l.b16 %v22
  %v63 = vunpack.c.l.b16 %v23
  %v64 = vunpack.c.l.b16 %v24
  %v65 = vunpack.c.l.b16 %v25
  %v66 = vunpack.c.l.b16 %v26
  %v67 = vunpack.c.l.b16 %v27
  %v68 = vunpack.c.l.b16 %v28
  %v69 = vunpack.c.l.b16 %v29
  %v70 = vpack.c.b16 %v59, %v58
  %v71 = vpack.c.b16 %v61, %v60
  %v72 = vpack.c.b16 %v63, %v62
  %v73 = vpack.c.b16 %v65, %v64
  %v74 = vpack.c.b16 %v67, %v66
  %v75 = vpack.c.b16 %v69, %v68
  %v92 = vunpack.c.l.b16 %v30
  %v93 = vunpack.c.h.b16 %v30
  %v94 = vunpack.c.l.b16 %v31
  %v95 = vunpack.c.l.b16 %v32
  %v96 = vunpack.c.h.b16 %v32
  %v97 = vunpack.c.l.b16 %v33
  %v98 = vunpack.c.l.b16 %v34
  %v99 = vunpack.c.h.b16 %v34
  %v100 = vunpack.c.l.b16 %v35
  %v101 = vunpack.c.l.b16 %v36
  %v102 = vunpack.c.h.b16 %v36
  %v103 = vunpack.c.l.b16 %v37
  %v104 = vunpack.c.l.b16 %v38
  %v105 = vunpack.c.h.b16 %v38
  %v106 = vunpack.c.l.b16 %v39
  %v107 = vunpack.c.l.b16 %v40
  %v108 = vunpack.c.h.b16 %v40
  %v109 = vunpack.c.l.b16 %v41
  %v110 = vunpack.c.l.b16 %v42
  %v111 = vunpack.c.h.b16 %v42
  %v112 = vunpack.c.l.b16 %v43
  %v113 = vunpack.c.l.b16 %v44
  %v114 = vunpack.c.h.b16 %v44
  %v115 = vunpack.c.l.b16 %v45
  %v116 = vpack.c.b16 %v95, %v92
  %v117 = vpack.c.b16 %v96, %v93
  %v118 = vpack.c.b16 %v97, %v94
  %v119 = vpack.c.b16 %v101, %v98
  %v120 = vpack.c.b16 %v102, %v99
  %v121 = vpack.c.b16 %v103, %v100
  %v122 = vpack.c.b16 %v107, %v104
  %v123 = vpack.c.b16 %v108, %v105
  %v124 = vpack.c.b16 %v109, %v106
  %v125 = vpack.c.b16 %v113, %v110
  %v126 = vpack.c.b16 %v114, %v111
  %v127 = vpack.c.b16 %v115, %v112
  %vm140 = vcmask 523264
  %v142 = vsel %vm140, %v70, 0
  %v145 = vsel %vm140, %v71, 0
  %v148 = vsel %vm140, %v72, 0
  %v151 = vsel %vm140, %v73, 0
  %v154 = vsel %vm140, %v74, 0
  %v157 = vsel %vm140, %v75, 0
  %159 = vmatprep.subr.bf16.mxu0 0
  %160 = vmatpush1.bf16.msra.mxu0 0
  %161 = vmatprep.subr.bf16.mxu0 0
  %162 = vmatpush1.bf16.msra.mxu0 0
  %163 = vmatprep.subr.bf16.mxu0 0
  %164 = vmatpush1.bf16.msra.mxu0 0
  %165 = vmatprep.subr.bf16.mxu0 0
  %166 = vmatpush1.bf16.msra.mxu0 0
  %167 = vmatprep.subr.bf16.mxu0 %v126
  %168 = vmatpush1.bf16.msra.mxu0 %v125
  %169 = vmatprep.subr.bf16.mxu0 %v123
  %170 = vmatpush1.bf16.msra.mxu0 %v122
  %171 = vmatprep.subr.bf16.mxu0 %v120
  %172 = vmatpush1.bf16.msra.mxu0 %v119
  %173 = vmatprep.subr.bf16.mxu0 %v117
  %174 = vmatpush1.bf16.msra.mxu0 %v116
  %175 = vmatprep.subr.bf16.mxu0 0
  %176 = vmatpush2.bf16.msra.mxu0 0
  %177 = vmatprep.subr.bf16.mxu0 0
  %178 = vmatpush2.bf16.msra.mxu0 0
  %179 = vmatprep.subr.bf16.mxu0 0
  %180 = vmatpush2.bf16.msra.mxu0 0
  %181 = vmatprep.subr.bf16.mxu0 0
  %182 = vmatpush2.bf16.msra.mxu0 0
  %183 = vmatprep.subr.bf16.mxu0 0
  %184 = vmatpush2.bf16.msra.mxu0 0
  %185 = vmatprep.subr.bf16.mxu0 0
  %186 = vmatpush2.bf16.msra.mxu0 0
  %187 = vmatprep.subr.bf16.mxu0 0
  %188 = vmatpush2.bf16.msra.mxu0 0
  %189 = vmatprep.subr.bf16.mxu0 0
  %190 = vmatpush2.bf16.msra.mxu0 0
  %191 = vmatprep.mubr.bf16.mxu0 0
  %192 = vmatmul.mubr.bf16.gmra.mxu0 %v142
  %v193 = vpop.f32.mrf.mxu0
  %v194 = vadd.f32 0.0, %v193
  %v195 = vpop.f32.mrf.mxu0
  %v196 = vadd.f32 0.0, %v195
  %v197 = vpop.f32.mrf.mxu0
  %v198 = vadd.f32 0.0, %v197
  %v199 = vpop.f32.mrf.mxu0
  %v200 = vadd.f32 0.0, %v199
  %201 = vmatprep.mubr.bf16.mxu0 0
  %202 = vmatmul.mubr.bf16.gmra.mxu0 %v145
  %v203 = vpop.f32.mrf.mxu0
  %v204 = vadd.f32 0.0, %v203
  %v205 = vpop.f32.mrf.mxu0
  %v206 = vadd.f32 0.0, %v205
  %v207 = vpop.f32.mrf.mxu0
  %v208 = vadd.f32 0.0, %v207
  %v209 = vpop.f32.mrf.mxu0
  %v210 = vadd.f32 0.0, %v209
  %211 = vmatprep.mubr.bf16.mxu0 0
  %212 = vmatmul.mubr.bf16.gmra.mxu0 %v148
  %v213 = vpop.f32.mrf.mxu0
  %v214 = vadd.f32 0.0, %v213
  %v215 = vpop.f32.mrf.mxu0
  %v216 = vadd.f32 0.0, %v215
  %v217 = vpop.f32.mrf.mxu0
  %v218 = vadd.f32 0.0, %v217
  %v219 = vpop.f32.mrf.mxu0
  %v220 = vadd.f32 0.0, %v219
  %221 = vmatprep.mubr.bf16.mxu0 0
  %222 = vmatmul.mubr.bf16.gmra.mxu0 %v151
  %v223 = vpop.f32.mrf.mxu0
  %v224 = vadd.f32 0.0, %v223
  %v225 = vpop.f32.mrf.mxu0
  %v226 = vadd.f32 0.0, %v225
  %v227 = vpop.f32.mrf.mxu0
  %v228 = vadd.f32 0.0, %v227
  %v229 = vpop.f32.mrf.mxu0
  %v230 = vadd.f32 0.0, %v229
  %231 = vmatprep.mubr.bf16.mxu0 0
  %232 = vmatmul.mubr.bf16.gmra.mxu0 %v154
  %v233 = vpop.f32.mrf.mxu0
  %v234 = vadd.f32 0.0, %v233
  %v235 = vpop.f32.mrf.mxu0
  %v236 = vadd.f32 0.0, %v235
  %v237 = vpop.f32.mrf.mxu0
  %v238 = vadd.f32 0.0, %v237
  %v239 = vpop.f32.mrf.mxu0
  %v240 = vadd.f32 0.0, %v239
  %241 = vmatprep.mubr.bf16.mxu0 0
  %242 = vmatmul.mubr.bf16.gmra.mxu0 %v157
  %v243 = vpop.f32.mrf.mxu0
  %v244 = vadd.f32 0.0, %v243
  %v245 = vpop.f32.mrf.mxu0
  %v246 = vadd.f32 0.0, %v245
  %v247 = vpop.f32.mrf.mxu0
  %v248 = vadd.f32 0.0, %v247
  %v249 = vpop.f32.mrf.mxu0
  %v250 = vadd.f32 0.0, %v249
  %251 = vdwg.mxu0
  %252 = vmatprep.subr.bf16.mxu0 0
  %253 = vmatpush1.bf16.msra.mxu0 0
  %254 = vmatprep.subr.bf16.mxu0 0
  %255 = vmatpush1.bf16.msra.mxu0 0
  %256 = vmatprep.subr.bf16.mxu0 0
  %257 = vmatpush1.bf16.msra.mxu0 0
  %258 = vmatprep.subr.bf16.mxu0 0
  %259 = vmatpush1.bf16.msra.mxu0 0
  %260 = vmatprep.subr.bf16.mxu0 0
  %261 = vmatpush1.bf16.msra.mxu0 %v127
  %262 = vmatprep.subr.bf16.mxu0 0
  %263 = vmatpush1.bf16.msra.mxu0 %v124
  %264 = vmatprep.subr.bf16.mxu0 0
  %265 = vmatpush1.bf16.msra.mxu0 %v121
  %266 = vmatprep.subr.bf16.mxu0 0
  %267 = vmatpush1.bf16.msra.mxu0 %v118
  %268 = vmatprep.subr.bf16.mxu0 0
  %269 = vmatpush2.bf16.msra.mxu0 0
  %270 = vmatprep.subr.bf16.mxu0 0
  %271 = vmatpush2.bf16.msra.mxu0 0
  %272 = vmatprep.subr.bf16.mxu0 0
  %273 = vmatpush2.bf16.msra.mxu0 0
  %274 = vmatprep.subr.bf16.mxu0 0
  %275 = vmatpush2.bf16.msra.mxu0 0
  %276 = vmatprep.subr.bf16.mxu0 0
  %277 = vmatpush2.bf16.msra.mxu0 0
  %278 = vmatprep.subr.bf16.mxu0 0
  %279 = vmatpush2.bf16.msra.mxu0 0
  %280 = vmatprep.subr.bf16.mxu0 0
  %281 = vmatpush2.bf16.msra.mxu0 0
  %282 = vmatprep.subr.bf16.mxu0 0
  %283 = vmatpush2.bf16.msra.mxu0 0
  %284 = vmatprep.mubr.bf16.mxu0 0
  %285 = vmatmul.mubr.bf16.gmra.mxu0 %v142
  %v286 = vpop.f32.mrf.mxu0
  %v287 = vadd.f32 0.0, %v286
  %v288 = vpop.f32.mrf.mxu0
  %v289 = vpop.f32.mrf.mxu0
  %v290 = vadd.f32 0.0, %v289
  %v291 = vpop.f32.mrf.mxu0
  %292 = vmatprep.mubr.bf16.mxu0 0
  %293 = vmatmul.mubr.bf16.gmra.mxu0 %v145
  %v294 = vpop.f32.mrf.mxu0
  %v295 = vadd.f32 0.0, %v294
  %v296 = vpop.f32.mrf.mxu0
  %v297 = vpop.f32.mrf.mxu0
  %v298 = vadd.f32 0.0, %v297
  %v299 = vpop.f32.mrf.mxu0
  %300 = vmatprep.mubr.bf16.mxu0 0
  %301 = vmatmul.mubr.bf16.gmra.mxu0 %v148
  %v302 = vpop.f32.mrf.mxu0
  %v303 = vadd.f32 0.0, %v302
  %v304 = vpop.f32.mrf.mxu0
  %v305 = vpop.f32.mrf.mxu0
  %v306 = vadd.f32 0.0, %v305
  %v307 = vpop.f32.mrf.mxu0
  %308 = vmatprep.mubr.bf16.mxu0 0
  %309 = vmatmul.mubr.bf16.gmra.mxu0 %v151
  %v310 = vpop.f32.mrf.mxu0
  %v311 = vadd.f32 0.0, %v310
  %v312 = vpop.f32.mrf.mxu0
  %v313 = vpop.f32.mrf.mxu0
  %v314 = vadd.f32 0.0, %v313
  %v315 = vpop.f32.mrf.mxu0
  %316 = vmatprep.mubr.bf16.mxu0 0
  %317 = vmatmul.mubr.bf16.gmra.mxu0 %v154
  %v318 = vpop.f32.mrf.mxu0
  %v319 = vadd.f32 0.0, %v318
  %v320 = vpop.f32.mrf.mxu0
  %v321 = vpop.f32.mrf.mxu0
  %v322 = vadd.f32 0.0, %v321
  %v323 = vpop.f32.mrf.mxu0
  %324 = vmatprep.mubr.bf16.mxu0 0
  %325 = vmatmul.mubr.bf16.gmra.mxu0 %v157
  %v326 = vpop.f32.mrf.mxu0
  %v327 = vadd.f32 0.0, %v326
  %v328 = vpop.f32.mrf.mxu0
  %v329 = vpop.f32.mrf.mxu0
  %v330 = vadd.f32 0.0, %v329
  %v331 = vpop.f32.mrf.mxu0
  %332 = vdwg.mxu0
  %v333 = vld [vmem:[%s2] sm:$0xff]
  %v334 = vld [vmem:[%s2 + $0x8] sm:$0xff]
  %v335 = vld [vmem:[%s2 + $0x10] sm:$0xff]
  %v336 = vld [vmem:[%s2 + $0x18] sm:$0xff]
  %v337 = vld [vmem:[%s2 + $0x20] sm:$0xf]
  %v338 = vld [vmem:[%s2 + $0x24] sm:$0xff]
  %v339 = vld [vmem:[%s2 + $0x2c] sm:$0xff]
  %v340 = vld [vmem:[%s2 + $0x34] sm:$0xff]
  %v341 = vld [vmem:[%s2 + $0x3c] sm:$0xff]
  %v342 = vld [vmem:[%s2 + $0x44] sm:$0xf]
  %v343 = vld [vmem:[%s2 + $0x48] sm:$0xff]
  %v344 = vld [vmem:[%s2 + $0x50] sm:$0xff]
  %v345 = vld [vmem:[%s2 + $0x58] sm:$0xff]
  %v346 = vld [vmem:[%s2 + $0x60] sm:$0xff]
  %v347 = vld [vmem:[%s2 + $0x68] sm:$0xf]
  %v348 = vld [vmem:[%s2 + $0x6c] sm:$0xff]
  %v349 = vld [vmem:[%s2 + $0x74] sm:$0xff]
  %v350 = vld [vmem:[%s2 + $0x7c] sm:$0xff]
  %v351 = vld [vmem:[%s2 + $0x84] sm:$0xff]
  %v352 = vld [vmem:[%s2 + $0x8c] sm:$0xf]
  %v353 = vld [vmem:[%s2 + $0x90] sm:$0xff]
  %v354 = vld [vmem:[%s2 + $0x98] sm:$0xff]
  %v355 = vld [vmem:[%s2 + $0xa0] sm:$0xff]
  %v356 = vld [vmem:[%s2 + $0xa8] sm:$0xff]
  %v357 = vld [vmem:[%s2 + $0xb0] sm:$0xf]
  %v358 = vld [vmem:[%s2 + $0xb4] sm:$0xff]
  %v359 = vld [vmem:[%s2 + $0xbc] sm:$0xff]
  %v360 = vld [vmem:[%s2 + $0xc4] sm:$0xff]
  %v361 = vld [vmem:[%s2 + $0xcc] sm:$0xff]
  %v362 = vld [vmem:[%s2 + $0xd4] sm:$0xf]
  %v363 = vld [vmem:[%s2 + $0xd8] sm:$0xff]
  %v364 = vld [vmem:[%s2 + $0xe0] sm:$0xff]
  %v365 = vld [vmem:[%s2 + $0xe8] sm:$0xff]
  %v366 = vld [vmem:[%s2 + $0xf0] sm:$0xff]
  %v367 = vld [vmem:[%s2 + $0xf8] sm:$0xf]
  %v368 = vld [vmem:[%s2 + $0xfc] sm:$0xff]
  %v369 = vld [vmem:[%s2 + $0x104] sm:$0xff]
  %v370 = vld [vmem:[%s2 + $0x10c] sm:$0xff]
  %v371 = vld [vmem:[%s2 + $0x114] sm:$0xff]
  %v372 = vld [vmem:[%s2 + $0x11c] sm:$0xf]
  %v373 = vld [vmem:[%s3] sm:$0xff]
  %v374 = vld [vmem:[%s3 + $0x8] sm:$0x1]
  %v377 = vlaneseq
  %v378 = vshrl.u32 %v377, 7
  %v379 = vsub.s32 0, %v378
  %v380 = vrot.slane %v373, %v379
  %v381 = vlaneseq
  %v382 = vshrl.u32 %v381, 7
  %v383 = vsub.s32 1, %v382
  %v384 = vrot.slane %v373, %v383
  %v385 = vlaneseq
  %v386 = vshrl.u32 %v385, 7
  %v387 = vsub.s32 2, %v386
  %v388 = vrot.slane %v373, %v387
  %v389 = vlaneseq
  %v390 = vshrl.u32 %v389, 7
  %v391 = vsub.s32 3, %v390
  %v392 = vrot.slane %v373, %v391
  %v393 = vlaneseq
  %v394 = vshrl.u32 %v393, 7
  %v395 = vsub.s32 4, %v394
  %v396 = vrot.slane %v373, %v395
  %v397 = vlaneseq
  %v398 = vshrl.u32 %v397, 7
  %v399 = vsub.s32 5, %v398
  %v400 = vrot.slane %v373, %v399
  %v401 = vlaneseq
  %v402 = vshrl.u32 %v401, 7
  %v403 = vsub.s32 6, %v402
  %v404 = vrot.slane %v373, %v403
  %v405 = vlaneseq
  %v406 = vshrl.u32 %v405, 7
  %v407 = vsub.s32 7, %v406
  %v408 = vrot.slane %v373, %v407
  %v409 = vlaneseq
  %v410 = vshrl.u32 %v409, 7
  %v411 = vsub.s32 0, %v410
  %v412 = vrot.slane %v374, %v411
  %v462 = vunpack.c.l.b16 %v333
  %v463 = vunpack.c.h.b16 %v333
  %v464 = vunpack.c.l.b16 %v334
  %v465 = vunpack.c.h.b16 %v334
  %v466 = vunpack.c.l.b16 %v335
  %v467 = vunpack.c.h.b16 %v335
  %v468 = vunpack.c.l.b16 %v336
  %v469 = vunpack.c.h.b16 %v336
  %v470 = vunpack.c.l.b16 %v337
  %v471 = vunpack.c.l.b16 %v338
  %v472 = vunpack.c.h.b16 %v338
  %v473 = vunpack.c.l.b16 %v339
  %v474 = vunpack.c.h.b16 %v339
  %v475 = vunpack.c.l.b16 %v340
  %v476 = vunpack.c.h.b16 %v340
  %v477 = vunpack.c.l.b16 %v341
  %v478 = vunpack.c.h.b16 %v341
  %v479 = vunpack.c.l.b16 %v342
  %v480 = vunpack.c.l.b16 %v343
  %v481 = vunpack.c.h.b16 %v343
  %v482 = vunpack.c.l.b16 %v344
  %v483 = vunpack.c.h.b16 %v344
  %v484 = vunpack.c.l.b16 %v345
  %v485 = vunpack.c.h.b16 %v345
  %v486 = vunpack.c.l.b16 %v346
  %v487 = vunpack.c.h.b16 %v346
  %v488 = vunpack.c.l.b16 %v347
  %v489 = vunpack.c.l.b16 %v348
  %v490 = vunpack.c.h.b16 %v348
  %v491 = vunpack.c.l.b16 %v349
  %v492 = vunpack.c.h.b16 %v349
  %v493 = vunpack.c.l.b16 %v350
  %v494 = vunpack.c.h.b16 %v350
  %v495 = vunpack.c.l.b16 %v351
  %v496 = vunpack.c.h.b16 %v351
  %v497 = vunpack.c.l.b16 %v352
  %v498 = vunpack.c.l.b16 %v353
  %v499 = vunpack.c.h.b16 %v353
  %v500 = vunpack.c.l.b16 %v354
  %v501 = vunpack.c.h.b16 %v354
  %v502 = vunpack.c.l.b16 %v355
  %v503 = vunpack.c.h.b16 %v355
  %v504 = vunpack.c.l.b16 %v356
  %v505 = vunpack.c.h.b16 %v356
  %v506 = vunpack.c.l.b16 %v357
  %v507 = vunpack.c.l.b16 %v358
  %v508 = vunpack.c.h.b16 %v358
  %v509 = vunpack.c.l.b16 %v359
  %v510 = vunpack.c.h.b16 %v359
  %v511 = vunpack.c.l.b16 %v360
  %v512 = vunpack.c.h.b16 %v360
  %v513 = vunpack.c.l.b16 %v361
  %v514 = vunpack.c.h.b16 %v361
  %v515 = vunpack.c.l.b16 %v362
  %v516 = vunpack.c.l.b16 %v363
  %v517 = vunpack.c.h.b16 %v363
  %v518 = vunpack.c.l.b16 %v364
  %v519 = vunpack.c.h.b16 %v364
  %v520 = vunpack.c.l.b16 %v365
  %v521 = vunpack.c.h.b16 %v365
  %v522 = vunpack.c.l.b16 %v366
  %v523 = vunpack.c.h.b16 %v366
  %v524 = vunpack.c.l.b16 %v367
  %v525 = vunpack.c.l.b16 %v368
  %v526 = vunpack.c.h.b16 %v368
  %v527 = vunpack.c.l.b16 %v369
  %v528 = vunpack.c.h.b16 %v369
  %v529 = vunpack.c.l.b16 %v370
  %v530 = vunpack.c.h.b16 %v370
  %v531 = vunpack.c.l.b16 %v371
  %v532 = vunpack.c.h.b16 %v371
  %v533 = vunpack.c.l.b16 %v372
  %v534 = vpack.c.b16 %v471, %v462
  %v535 = vpack.c.b16 %v472, %v463
  %v536 = vpack.c.b16 %v473, %v464
  %v537 = vpack.c.b16 %v474, %v465
  %v538 = vpack.c.b16 %v475, %v466
  %v539 = vpack.c.b16 %v476, %v467
  %v540 = vpack.c.b16 %v477, %v468
  %v541 = vpack.c.b16 %v478, %v469
  %v542 = vpack.c.b16 %v479, %v470
  %v543 = vpack.c.b16 %v489, %v480
  %v544 = vpack.c.b16 %v490, %v481
  %v545 = vpack.c.b16 %v491, %v482
  %v546 = vpack.c.b16 %v492, %v483
  %v547 = vpack.c.b16 %v493, %v484
  %v548 = vpack.c.b16 %v494, %v485
  %v549 = vpack.c.b16 %v495, %v486
  %v550 = vpack.c.b16 %v496, %v487
  %v551 = vpack.c.b16 %v497, %v488
  %v552 = vpack.c.b16 %v507, %v498
  %v553 = vpack.c.b16 %v508, %v499
  %v554 = vpack.c.b16 %v509, %v500
  %v555 = vpack.c.b16 %v510, %v501
  %v556 = vpack.c.b16 %v511, %v502
  %v557 = vpack.c.b16 %v512, %v503
  %v558 = vpack.c.b16 %v513, %v504
  %v559 = vpack.c.b16 %v514, %v505
  %v560 = vpack.c.b16 %v515, %v506
  %v561 = vpack.c.b16 %v525, %v516
  %v562 = vpack.c.b16 %v526, %v517
  %v563 = vpack.c.b16 %v527, %v518
  %v564 = vpack.c.b16 %v528, %v519
  %v565 = vpack.c.b16 %v529, %v520
  %v566 = vpack.c.b16 %v530, %v521
  %v567 = vpack.c.b16 %v531, %v522
  %v568 = vpack.c.b16 %v532, %v523
  %v569 = vpack.c.b16 %v533, %v524
  %606 = vmatprep.subr.bf16.mxu0 0
  %607 = vmatpush1.bf16.msra.mxu0 0
  %608 = vmatprep.subr.bf16.mxu0 0
  %609 = vmatpush1.bf16.msra.mxu0 0
  %610 = vmatprep.subr.bf16.mxu0 0
  %611 = vmatpush1.bf16.msra.mxu0 0
  %612 = vmatprep.subr.bf16.mxu0 0
  %613 = vmatpush1.bf16.msra.mxu0 0
  %614 = vmatprep.subr.bf16.mxu0 %v562
  %615 = vmatpush1.bf16.msra.mxu0 %v561
  %616 = vmatprep.subr.bf16.mxu0 %v553
  %617 = vmatpush1.bf16.msra.mxu0 %v552
  %618 = vmatprep.subr.bf16.mxu0 %v544
  %619 = vmatpush1.bf16.msra.mxu0 %v543
  %620 = vmatprep.subr.bf16.mxu0 %v535
  %621 = vmatpush1.bf16.msra.mxu0 %v534
  %622 = vmatprep.subr.bf16.mxu0 0
  %623 = vmatpush2.bf16.msra.mxu0 0
  %624 = vmatprep.subr.bf16.mxu0 0
  %625 = vmatpush2.bf16.msra.mxu0 0
  %626 = vmatprep.subr.bf16.mxu0 0
  %627 = vmatpush2.bf16.msra.mxu0 0
  %628 = vmatprep.subr.bf16.mxu0 0
  %629 = vmatpush2.bf16.msra.mxu0 0
  %630 = vmatprep.subr.bf16.mxu0 0
  %631 = vmatpush2.bf16.msra.mxu0 0
  %632 = vmatprep.subr.bf16.mxu0 0
  %633 = vmatpush2.bf16.msra.mxu0 0
  %634 = vmatprep.subr.bf16.mxu0 0
  %635 = vmatpush2.bf16.msra.mxu0 0
  %636 = vmatprep.subr.bf16.mxu0 0
  %637 = vmatpush2.bf16.msra.mxu0 0
  %638 = vmatprep.mubr.bf16.mxu0 0
  %639 = vmatmul.mubr.bf16.gmra.mxu0 %v148
  %v640 = vpop.f32.mrf.mxu0
  %v641 = vadd.f32 %v380, %v640
  %v642 = vpop.f32.mrf.mxu0
  %v643 = vadd.f32 %v384, %v642
  %v644 = vpop.f32.mrf.mxu0
  %v645 = vadd.f32 %v380, %v644
  %v646 = vpop.f32.mrf.mxu0
  %v647 = vadd.f32 %v384, %v646
  %648 = vmatprep.mubr.bf16.mxu0 0
  %649 = vmatmul.mubr.bf16.gmra.mxu0 %v151
  %v650 = vpop.f32.mrf.mxu0
  %v651 = vadd.f32 %v380, %v650
  %v652 = vpop.f32.mrf.mxu0
  %v653 = vadd.f32 %v384, %v652
  %v654 = vpop.f32.mrf.mxu0
  %v655 = vadd.f32 %v380, %v654
  %v656 = vpop.f32.mrf.mxu0
  %v657 = vadd.f32 %v384, %v656
  %658 = vdwg.mxu0
  %659 = vmatprep.subr.bf16.mxu0 0
  %660 = vmatpush1.bf16.msra.mxu0 0
  %661 = vmatprep.subr.bf16.mxu0 0
  %662 = vmatpush1.bf16.msra.mxu0 0
  %663 = vmatprep.subr.bf16.mxu0 0
  %664 = vmatpush1.bf16.msra.mxu0 0
  %665 = vmatprep.subr.bf16.mxu0 0
  %666 = vmatpush1.bf16.msra.mxu0 0
  %667 = vmatprep.subr.bf16.mxu0 %v564
  %668 = vmatpush1.bf16.msra.mxu0 %v563
  %669 = vmatprep.subr.bf16.mxu0 %v555
  %670 = vmatpush1.bf16.msra.mxu0 %v554
  %671 = vmatprep.subr.bf16.mxu0 %v546
  %672 = vmatpush1.bf16.msra.mxu0 %v545
  %673 = vmatprep.subr.bf16.mxu0 %v537
  %674 = vmatpush1.bf16.msra.mxu0 %v536
  %675 = vmatprep.subr.bf16.mxu0 0
  %676 = vmatpush2.bf16.msra.mxu0 0
  %677 = vmatprep.subr.bf16.mxu0 0
  %678 = vmatpush2.bf16.msra.mxu0 0
  %679 = vmatprep.subr.bf16.mxu0 0
  %680 = vmatpush2.bf16.msra.mxu0 0
  %681 = vmatprep.subr.bf16.mxu0 0
  %682 = vmatpush2.bf16.msra.mxu0 0
  %683 = vmatprep.subr.bf16.mxu0 0
  %684 = vmatpush2.bf16.msra.mxu0 0
  %685 = vmatprep.subr.bf16.mxu0 0
  %686 = vmatpush2.bf16.msra.mxu0 0
  %687 = vmatprep.subr.bf16.mxu0 0
  %688 = vmatpush2.bf16.msra.mxu0 0
  %689 = vmatprep.subr.bf16.mxu0 0
  %690 = vmatpush2.bf16.msra.mxu0 0
  %691 = vmatprep.mubr.bf16.mxu0 0
  %692 = vmatmul.mubr.bf16.gmra.mxu0 %v148
  %v693 = vpop.f32.mrf.mxu0
  %v694 = vadd.f32 %v388, %v693
  %v695 = vpop.f32.mrf.mxu0
  %v696 = vadd.f32 %v392, %v695
  %v697 = vpop.f32.mrf.mxu0
  %v698 = vadd.f32 %v388, %v697
  %v699 = vpop.f32.mrf.mxu0
  %v700 = vadd.f32 %v392, %v699
  %701 = vmatprep.mubr.bf16.mxu0 0
  %702 = vmatmul.mubr.bf16.gmra.mxu0 %v151
  %v703 = vpop.f32.mrf.mxu0
  %v704 = vadd.f32 %v388, %v703
  %v705 = vpop.f32.mrf.mxu0
  %v706 = vadd.f32 %v392, %v705
  %v707 = vpop.f32.mrf.mxu0
  %v708 = vadd.f32 %v388, %v707
  %v709 = vpop.f32.mrf.mxu0
  %v710 = vadd.f32 %v392, %v709
  %711 = vdwg.mxu0
  %712 = vmatprep.subr.bf16.mxu0 0
  %713 = vmatpush1.bf16.msra.mxu0 0
  %714 = vmatprep.subr.bf16.mxu0 0
  %715 = vmatpush1.bf16.msra.mxu0 0
  %716 = vmatprep.subr.bf16.mxu0 0
  %717 = vmatpush1.bf16.msra.mxu0 0
  %718 = vmatprep.subr.bf16.mxu0 0
  %719 = vmatpush1.bf16.msra.mxu0 0
  %720 = vmatprep.subr.bf16.mxu0 %v566
  %721 = vmatpush1.bf16.msra.mxu0 %v565
  %722 = vmatprep.subr.bf16.mxu0 %v557
  %723 = vmatpush1.bf16.msra.mxu0 %v556
  %724 = vmatprep.subr.bf16.mxu0 %v548
  %725 = vmatpush1.bf16.msra.mxu0 %v547
  %726 = vmatprep.subr.bf16.mxu0 %v539
  %727 = vmatpush1.bf16.msra.mxu0 %v538
  %728 = vmatprep.subr.bf16.mxu0 0
  %729 = vmatpush2.bf16.msra.mxu0 0
  %730 = vmatprep.subr.bf16.mxu0 0
  %731 = vmatpush2.bf16.msra.mxu0 0
  %732 = vmatprep.subr.bf16.mxu0 0
  %733 = vmatpush2.bf16.msra.mxu0 0
  %734 = vmatprep.subr.bf16.mxu0 0
  %735 = vmatpush2.bf16.msra.mxu0 0
  %736 = vmatprep.subr.bf16.mxu0 0
  %737 = vmatpush2.bf16.msra.mxu0 0
  %738 = vmatprep.subr.bf16.mxu0 0
  %739 = vmatpush2.bf16.msra.mxu0 0
  %740 = vmatprep.subr.bf16.mxu0 0
  %741 = vmatpush2.bf16.msra.mxu0 0
  %742 = vmatprep.subr.bf16.mxu0 0
  %743 = vmatpush2.bf16.msra.mxu0 0
  %744 = vmatprep.mubr.bf16.mxu0 0
  %745 = vmatmul.mubr.bf16.gmra.mxu0 %v148
  %v746 = vpop.f32.mrf.mxu0
  %v747 = vadd.f32 %v396, %v746
  %v748 = vpop.f32.mrf.mxu0
  %v749 = vadd.f32 %v400, %v748
  %v750 = vpop.f32.mrf.mxu0
  %v751 = vadd.f32 %v396, %v750
  %v752 = vpop.f32.mrf.mxu0
  %v753 = vadd.f32 %v400, %v752
  %754 = vmatprep.mubr.bf16.mxu0 0
  %755 = vmatmul.mubr.bf16.gmra.mxu0 %v151
  %v756 = vpop.f32.mrf.mxu0
  %v757 = vadd.f32 %v396, %v756
  %v758 = vpop.f32.mrf.mxu0
  %v759 = vadd.f32 %v400, %v758
  %v760 = vpop.f32.mrf.mxu0
  %v761 = vadd.f32 %v396, %v760
  %v762 = vpop.f32.mrf.mxu0
  %v763 = vadd.f32 %v400, %v762
  %764 = vdwg.mxu0
  %765 = vmatprep.subr.bf16.mxu0 0
  %766 = vmatpush1.bf16.msra.mxu0 0
  %767 = vmatprep.subr.bf16.mxu0 0
  %768 = vmatpush1.bf16.msra.mxu0 0
  %769 = vmatprep.subr.bf16.mxu0 0
  %770 = vmatpush1.bf16.msra.mxu0 0
  %771 = vmatprep.subr.bf16.mxu0 0
  %772 = vmatpush1.bf16.msra.mxu0 0
  %773 = vmatprep.subr.bf16.mxu0 %v568
  %774 = vmatpush1.bf16.msra.mxu0 %v567
  %775 = vmatprep.subr.bf16.mxu0 %v559
  %776 = vmatpush1.bf16.msra.mxu0 %v558
  %777 = vmatprep.subr.bf16.mxu0 %v550
  %778 = vmatpush1.bf16.msra.mxu0 %v549
  %779 = vmatprep.subr.bf16.mxu0 %v541
  %780 = vmatpush1.bf16.msra.mxu0 %v540
  %781 = vmatprep.subr.bf16.mxu0 0
  %782 = vmatpush2.bf16.msra.mxu0 0
  %783 = vmatprep.subr.bf16.mxu0 0
  %784 = vmatpush2.bf16.msra.mxu0 0
  %785 = vmatprep.subr.bf16.mxu0 0
  %786 = vmatpush2.bf16.msra.mxu0 0
  %787 = vmatprep.subr.bf16.mxu0 0
  %788 = vmatpush2.bf16.msra.mxu0 0
  %789 = vmatprep.subr.bf16.mxu0 0
  %790 = vmatpush2.bf16.msra.mxu0 0
  %791 = vmatprep.subr.bf16.mxu0 0
  %792 = vmatpush2.bf16.msra.mxu0 0
  %793 = vmatprep.subr.bf16.mxu0 0
  %794 = vmatpush2.bf16.msra.mxu0 0
  %795 = vmatprep.subr.bf16.mxu0 0
  %796 = vmatpush2.bf16.msra.mxu0 0
  %797 = vmatprep.mubr.bf16.mxu0 0
  %798 = vmatmul.mubr.bf16.gmra.mxu0 %v148
  %v799 = vpop.f32.mrf.mxu0
  %v800 = vadd.f32 %v404, %v799
  %v801 = vpop.f32.mrf.mxu0
  %v802 = vadd.f32 %v408, %v801
  %v803 = vpop.f32.mrf.mxu0
  %v804 = vadd.f32 %v404, %v803
  %v805 = vpop.f32.mrf.mxu0
  %v806 = vadd.f32 %v408, %v805
  %807 = vmatprep.mubr.bf16.mxu0 0
  %808 = vmatmul.mubr.bf16.gmra.mxu0 %v151
  %v809 = vpop.f32.mrf.mxu0
  %v810 = vadd.f32 %v404, %v809
  %v811 = vpop.f32.mrf.mxu0
  %v812 = vadd.f32 %v408, %v811
  %v813 = vpop.f32.mrf.mxu0
  %v814 = vadd.f32 %v404, %v813
  %v815 = vpop.f32.mrf.mxu0
  %v816 = vadd.f32 %v408, %v815
  %817 = vdwg.mxu0
  %818 = vmatprep.subr.bf16.mxu0 0
  %819 = vmatpush1.bf16.msra.mxu0 0
  %820 = vmatprep.subr.bf16.mxu0 0
  %821 = vmatpush1.bf16.msra.mxu0 0
  %822 = vmatprep.subr.bf16.mxu0 0
  %823 = vmatpush1.bf16.msra.mxu0 0
  %824 = vmatprep.subr.bf16.mxu0 0
  %825 = vmatpush1.bf16.msra.mxu0 0
  %826 = vmatprep.subr.bf16.mxu0 0
  %827 = vmatpush1.bf16.msra.mxu0 %v569
  %828 = vmatprep.subr.bf16.mxu0 0
  %829 = vmatpush1.bf16.msra.mxu0 %v560
  %830 = vmatprep.subr.bf16.mxu0 0
  %831 = vmatpush1.bf16.msra.mxu0 %v551
  %832 = vmatprep.subr.bf16.mxu0 0
  %833 = vmatpush1.bf16.msra.mxu0 %v542
  %834 = vmatprep.subr.bf16.mxu0 0
  %835 = vmatpush2.bf16.msra.mxu0 0
  %836 = vmatprep.subr.bf16.mxu0 0
  %837 = vmatpush2.bf16.msra.mxu0 0
  %838 = vmatprep.subr.bf16.mxu0 0
  %839 = vmatpush2.bf16.msra.mxu0 0
  %840 = vmatprep.subr.bf16.mxu0 0
  %841 = vmatpush2.bf16.msra.mxu0 0
  %842 = vmatprep.subr.bf16.mxu0 0
  %843 = vmatpush2.bf16.msra.mxu0 0
  %844 = vmatprep.subr.bf16.mxu0 0
  %845 = vmatpush2.bf16.msra.mxu0 0
  %846 = vmatprep.subr.bf16.mxu0 0
  %847 = vmatpush2.bf16.msra.mxu0 0
  %848 = vmatprep.subr.bf16.mxu0 0
  %849 = vmatpush2.bf16.msra.mxu0 0
  %850 = vmatprep.mubr.bf16.mxu0 0
  %851 = vmatmul.mubr.bf16.gmra.mxu0 %v148
  %v852 = vpop.f32.mrf.mxu0
  %v853 = vadd.f32 %v412, %v852
  %v854 = vpop.f32.mrf.mxu0
  %v855 = vpop.f32.mrf.mxu0
  %v856 = vadd.f32 %v412, %v855
  %v857 = vpop.f32.mrf.mxu0
  %858 = vmatprep.mubr.bf16.mxu0 0
  %859 = vmatmul.mubr.bf16.gmra.mxu0 %v151
  %v860 = vpop.f32.mrf.mxu0
  %v861 = vadd.f32 %v412, %v860
  %v862 = vpop.f32.mrf.mxu0
  %v863 = vpop.f32.mrf.mxu0
  %v864 = vadd.f32 %v412, %v863
  %v865 = vpop.f32.mrf.mxu0
  %866 = vdwg.mxu0
  %v867 = vmul.f32 %v641, %v194
  %v868 = vmul.f32 %v645, %v198
  %v869 = vmul.f32 %v651, %v204
  %v870 = vmul.f32 %v655, %v208
  %v871 = vadd.f32 %v867, 0.0
  %v872 = vadd.f32 %v868, 0.0
  %v873 = vadd.f32 %v869, 0.0
  %v874 = vadd.f32 %v870, 0.0
  %v875 = vmul.f32 %v643, %v196
  %v876 = vmul.f32 %v647, %v200
  %v877 = vmul.f32 %v653, %v206
  %v878 = vmul.f32 %v657, %v210
  %v879 = vadd.f32 %v871, %v875
  %v880 = vadd.f32 %v872, %v876
  %v881 = vadd.f32 %v873, %v877
  %v882 = vadd.f32 %v874, %v878
  %v883 = vmul.f32 %v694, %v287
  %v884 = vmul.f32 %v698, %v290
  %v885 = vmul.f32 %v704, %v295
  %v886 = vmul.f32 %v708, %v298
  %v887 = vadd.f32 %v879, %v883
  %v888 = vadd.f32 %v880, %v884
  %v889 = vadd.f32 %v881, %v885
  %v890 = vadd.f32 %v882, %v886
  %v891 = vmul.f32 %v696, %v214
  %v892 = vmul.f32 %v700, %v218
  %v893 = vmul.f32 %v706, %v224
  %v894 = vmul.f32 %v710, %v228
  %v895 = vadd.f32 %v887, %v891
  %v896 = vadd.f32 %v888, %v892
  %v897 = vadd.f32 %v889, %v893
  %v898 = vadd.f32 %v890, %v894
  %v899 = vmul.f32 %v747, %v216
  %v900 = vmul.f32 %v751, %v220
  %v901 = vmul.f32 %v757, %v226
  %v902 = vmul.f32 %v761, %v230
  %v903 = vadd.f32 %v895, %v899
  %v904 = vadd.f32 %v896, %v900
  %v905 = vadd.f32 %v897, %v901
  %v906 = vadd.f32 %v898, %v902
  %v907 = vmul.f32 %v749, %v303
  %v908 = vmul.f32 %v753, %v306
  %v909 = vmul.f32 %v759, %v311
  %v910 = vmul.f32 %v763, %v314
  %v911 = vadd.f32 %v903, %v907
  %v912 = vadd.f32 %v904, %v908
  %v913 = vadd.f32 %v905, %v909
  %v914 = vadd.f32 %v906, %v910
  %v915 = vmul.f32 %v800, %v234
  %v916 = vmul.f32 %v804, %v238
  %v917 = vmul.f32 %v810, %v244
  %v918 = vmul.f32 %v814, %v248
  %v919 = vadd.f32 %v911, %v915
  %v920 = vadd.f32 %v912, %v916
  %v921 = vadd.f32 %v913, %v917
  %v922 = vadd.f32 %v914, %v918
  %v923 = vmul.f32 %v802, %v236
  %v924 = vmul.f32 %v806, %v240
  %v925 = vmul.f32 %v812, %v246
  %v926 = vmul.f32 %v816, %v250
  %v927 = vadd.f32 %v919, %v923
  %v928 = vadd.f32 %v920, %v924
  %v929 = vadd.f32 %v921, %v925
  %v930 = vadd.f32 %v922, %v926
  %v931 = vmul.f32 %v853, %v319
  %v932 = vmul.f32 %v856, %v322
  %v933 = vmul.f32 %v861, %v327
  %v934 = vmul.f32 %v864, %v330
  %v935 = vadd.f32 %v927, %v931
  %v936 = vadd.f32 %v928, %v932
  %v937 = vadd.f32 %v929, %v933
  %v938 = vadd.f32 %v930, %v934
  %939 = vst [vmem:[%s4] sm:$0xff] %v935
  %940 = vst [vmem:[%s4 + $0x8] sm:$0xff] %v936
  %941 = vst [vmem:[%s4 + $0x10] sm:$0xff] %v937
  %942 = vst [vmem:[%s4 + $0x18] sm:$0xff] %v938
  // Predicated region
  $region18: #{inv2d_forward.1} parent=0 // pred_check
    _
  $region19: #{inv2d_forward.1} parent=0 // pred_check_branch
    %944 = sbr.rel (0) target = $region21
  $region20: #{inv2d_forward.1} parent=0 // pred_region
    _
  $region21: #{inv2d_forward.1} parent=0 // pred_fallthru
    _
  // Predicated region
  $region22: #{inv2d_forward.1} parent=0 // pred_check
    _
  $region23: #{inv2d_forward.1} parent=0 // pred_check_branch
    %946 = sbr.rel (0) target = $region25
  $region24: #{inv2d_forward.1} parent=0 // pred_region
    _
  $region25: #{inv2d_forward.1} parent=0 // pred_fallthru
    _

</llo_original>
